<compile_context>
chip_gen: v5e
topology: v5e:2x2
jax: 0.10.0
libtpu: 0.0.40
codegen_flags: <defaults>
</compile_context>

<pallas_src>
import functools

import jax
import jax.numpy as jnp
from jax.experimental import pallas as pl
from jax.experimental.pallas import tpu as pltpu

_VMEM_LIMIT = 48 * 1024 * 1024      # fits v7x's 64 MiB VMEM with headroom
_BN_EPS = 1e-5


def _round_up(x, m):
    return (x + m - 1) // m * m


def _choose_tk(kp):
    """kp is a multiple of 128; pick a K tile that divides it."""
    if kp <= 1024:
        return kp
    for tk in (512, 256, 128):
        if kp % tk == 0:
            return tk
    return 128


# ----------------------------- Pallas kernels -----------------------------

def _matmul_affine_kernel(*refs, relu, has_residual):
    # Tiled (tm,tk)@(tk,tn) on the MXU with f32 accumulation in VMEM scratch.
    # Epilogue (last K step): per-channel affine (folded BN / bias), optional
    # residual add, optional ReLU, cast to output dtype.
    if has_residual:
        a_ref, w_ref, scale_ref, shift_ref, res_ref, o_ref, acc_ref = refs
    else:
        a_ref, w_ref, scale_ref, shift_ref, o_ref, acc_ref = refs
        res_ref = None
    k = pl.program_id(2)

    @pl.when(k == 0)
    def _init():
        acc_ref[...] = jnp.zeros_like(acc_ref)

    acc_ref[...] += jnp.dot(a_ref[...], w_ref[...],
                            preferred_element_type=jnp.float32)

    @pl.when(k == pl.num_programs(2) - 1)
    def _finalize():
        y = acc_ref[...] * scale_ref[...] + shift_ref[...]
        if res_ref is not None:
            y = y + res_ref[...].astype(jnp.float32)
        if relu:
            y = jnp.maximum(y, 0.0)
        o_ref[...] = y.astype(o_ref.dtype)


def _maxpool_kernel(x_ref, o_ref, acc_ref):
    # Running max over the 3x3 taps (grid axis 1), f32 accumulator in scratch.
    t = pl.program_id(1)

    @pl.when(t == 0)
    def _init():
        acc_ref[...] = x_ref[0].astype(jnp.float32)

    @pl.when(t > 0)
    def _acc():
        acc_ref[...] = jnp.maximum(acc_ref[...], x_ref[0].astype(jnp.float32))

    @pl.when(t == pl.num_programs(1) - 1)
    def _finalize():
        o_ref[...] = acc_ref[...].astype(o_ref.dtype)


def _mean_reduce_kernel(x_ref, o_ref):
    # mean over the flattened spatial axis (adaptive avg-pool to 1x1), f32 math.
    o_ref[...] = jnp.mean(x_ref[...].astype(jnp.float32), axis=1)


# ----------------------------- Pallas wrappers -----------------------------

def matmul_affine(a, w, scale, shift, *, relu, residual=None,
                  out_dtype=jnp.bfloat16, tm=128, tn=128):
    """out[:M,:N] = act((a @ w) * scale + shift [+ residual]).

    bf16 MXU operands, f32 accumulation, tiled grid (M//tm, N//tn, K//tk).
    """
    M, K = a.shape
    K2, N = w.shape
    assert K == K2
    Mp, Np = _round_up(M, tm), _round_up(N, tn)
    Kp = _round_up(K, 128)
    tk = _choose_tk(Kp)

    a_p = jnp.pad(a.astype(jnp.bfloat16), ((0, Mp - M), (0, Kp - K)))
    w_p = jnp.pad(w.astype(jnp.bfloat16), ((0, Kp - K), (0, Np - N)))
    scale_p = jnp.pad(scale.astype(jnp.float32), (0, Np - N)).reshape(1, Np)
    shift_p = jnp.pad(shift.astype(jnp.float32), (0, Np - N)).reshape(1, Np)

    in_specs = [
        pl.BlockSpec((tm, tk), lambda i, j, k: (i, k)),
        pl.BlockSpec((tk, tn), lambda i, j, k: (k, j)),
        # BN scale/shift stay VMEM-resident across the K axis:
        pl.BlockSpec((1, tn), lambda i, j, k: (0, j)),
        pl.BlockSpec((1, tn), lambda i, j, k: (0, j)),
    ]
    inputs = [a_p, w_p, scale_p, shift_p]
    has_residual = residual is not None
    if has_residual:
        r_p = jnp.pad(residual.astype(jnp.bfloat16), ((0, Mp - M), (0, Np - N)))
        in_specs.append(pl.BlockSpec((tm, tn), lambda i, j, k: (i, j)))
        inputs.append(r_p)

    out_itemsize = jnp.dtype(out_dtype).itemsize
    cost = pl.CostEstimate(
        flops=2 * Mp * Np * Kp,
        transcendentals=0,
        bytes_accessed=2 * Mp * Kp + 2 * Kp * Np + out_itemsize * Mp * Np + 8 * Np,
    )

    out = pl.pallas_call(
        functools.partial(_matmul_affine_kernel, relu=relu,
                          has_residual=has_residual),
        out_shape=jax.ShapeDtypeStruct((Mp, Np), out_dtype),
        grid=(Mp // tm, Np // tn, Kp // tk),
        in_specs=in_specs,
        out_specs=pl.BlockSpec((tm, tn), lambda i, j, k: (i, j)),
        scratch_shapes=[pltpu.VMEM((tm, tn), jnp.float32)],
        compiler_params=pltpu.CompilerParams(
            dimension_semantics=("parallel", "parallel", "arbitrary"),
            vmem_limit_bytes=_VMEM_LIMIT),
        cost_estimate=cost,
    )(*inputs)
    return out[:M, :N]


def maxpool2d_3x3_s2_p1(x):
    """PyTorch MaxPool2d(kernel_size=3, stride=2, padding=1); x is NHWC."""
    N, H, W, C = x.shape
    k, s, pad = 3, 2, 1
    xp = jnp.pad(x, ((0, 0), (pad, pad), (pad, pad), (0, 0)),
                 constant_values=float("-inf"))
    oh = (H + 2 * pad - k) // s + 1
    ow = (W + 2 * pad - k) // s + 1
    views = [xp[:, i:i + s * (oh - 1) + 1:s, j:j + s * (ow - 1) + 1:s, :]
             for i in range(k) for j in range(k)]
    M = N * oh * ow
    # TODO(synk): the 9 strided views are still materialized by XLA in HBM; an
    # element-offset BlockSpec over the padded NHWC map would remove that copy.
    stacked = jnp.stack(views, axis=0).reshape(k * k, M, C)
    tm = _round_up(M, 16) if M <= 1024 else 512
    Mp, Cp = _round_up(M, tm), _round_up(C, 128)
    stacked = jnp.pad(stacked, ((0, 0), (0, Mp - M), (0, Cp - C)))
    out = pl.pallas_call(
        _maxpool_kernel,
        out_shape=jax.ShapeDtypeStruct((Mp, Cp), x.dtype),
        grid=(Mp // tm, k * k),
        in_specs=[pl.BlockSpec((1, tm, Cp), lambda m, t: (t, m, 0))],
        out_specs=pl.BlockSpec((tm, Cp), lambda m, t: (m, 0)),
        scratch_shapes=[pltpu.VMEM((tm, Cp), jnp.float32)],
        compiler_params=pltpu.CompilerParams(
            dimension_semantics=("parallel", "arbitrary"),
            vmem_limit_bytes=_VMEM_LIMIT),
    )(stacked)
    return out[:M, :C].reshape(N, oh, ow, C)


def global_avg_pool(x):
    """AdaptiveAvgPool2d((1,1)) + flatten; x is NHWC -> (N, C) in f32."""
    N, H, W, C = x.shape
    xr = x.reshape(N, H * W, C)
    out = pl.pallas_call(
        _mean_reduce_kernel,
        out_shape=jax.ShapeDtypeStruct((N, C), jnp.float32),
        grid=(1,),
        in_specs=[pl.BlockSpec((N, H * W, C), lambda i: (0, 0, 0))],
        out_specs=pl.BlockSpec((N, C), lambda i: (0, 0)),
        compiler_params=pltpu.CompilerParams(vmem_limit_bytes=_VMEM_LIMIT),
    )(xr)
    return out


# ----------------------------- conv / blocks glue -----------------------------

def im2col(x, kh, kw, stride, padding):
    """x: NHWC (bf16) -> patches (N*OH*OW, KH*KW*C); K-order matches (KH, KW, Cin)."""
    # TODO(synk): im2col still expands the activation in HBM for 3x3/7x7 convs; a
    # shifted-tap accumulation with element-offset BlockSpecs would avoid it.
    N, H, W, C = x.shape
    xp = jnp.pad(x, ((0, 0), (padding, padding), (padding, padding), (0, 0)))
    oh = (H + 2 * padding - kh) // stride + 1
    ow = (W + 2 * padding - kw) // stride + 1
    cols = []
    for i in range(kh):
        for j in range(kw):
            cols.append(xp[:, i:i + stride * (oh - 1) + 1:stride,
                            j:j + stride * (ow - 1) + 1:stride, :])
    patches = jnp.stack(cols, axis=3)  # (N, oh, ow, kh*kw, C)
    return patches.reshape(N * oh * ow, kh * kw * C), oh, ow


def conv_bn(x, w, bn, *, stride, padding, relu, residual=None):
    """Conv2d(bias=False, PyTorch OIHW weight) + eval-mode BN (+residual) (+ReLU)."""
    gamma, beta, mean, var = bn
    cout, cin, kh, kw = w.shape
    patches, oh, ow = im2col(x, kh, kw, stride, padding)
    w_mat = jnp.transpose(w, (2, 3, 1, 0)).reshape(kh * kw * cin, cout)
    scale = gamma / jnp.sqrt(var + _BN_EPS)
    shift = beta - mean * scale
    y = matmul_affine(patches, w_mat, scale, shift, relu=relu, residual=residual)
    return y.reshape(x.shape[0], oh, ow, cout)


def basic_block(x, blk):
    s = blk["stride"]
    out1 = conv_bn(x, blk["conv1_w"], blk["bn1"], stride=s, padding=1, relu=True)
    if "down_w" in blk:
        identity = conv_bn(x, blk["down_w"], blk["down_bn"],
                           stride=s, padding=0, relu=False)
    else:
        identity = x
    Ni, Hi, Wi, Ci = identity.shape
    res = identity.reshape(Ni * Hi * Wi, Ci)
    # residual add + ReLU fused into conv2's matmul epilogue
    return conv_bn(out1, blk["conv2_w"], blk["bn2"], stride=1, padding=1,
                   relu=True, residual=res)


def slice25dcnn_forward(params, x_nchw):
    x = jnp.transpose(x_nchw, (0, 2, 3, 1)).astype(jnp.bfloat16)  # NCHW -> NHWC bf16
    # stem: conv1(7x7, s2, p3) + bn1 + relu + maxpool(3x3, s2, p1)
    x = conv_bn(x, params["conv1_w"], params["bn1"], stride=2, padding=3, relu=True)
    x = maxpool2d_3x3_s2_p1(x)
    # layer1..layer4 (2 BasicBlocks each)
    for blocks in params["layers"]:
        for blk in blocks:
            x = basic_block(x, blk)
    # avgpool + flatten + fc(512 -> 1), then squeeze(1)
    feat = global_avg_pool(x)                                   # (N, 512) f32
    logits = matmul_affine(feat, params["fc_w"].T,
                           jnp.ones((1,), jnp.float32), params["fc_b"],
                           relu=False, out_dtype=jnp.float32)   # (N, 1)
    return logits[:, 0]


# ----------------------------- deterministic params -----------------------------

def _init_conv(key, cout, cin, k):
    fan_in = cin * k * k
    return (jax.random.normal(key, (cout, cin, k, k), dtype=jnp.float32)
            * (2.0 / fan_in) ** 0.5)


def _init_bn(key, c):
    k1, k2, k3, k4 = jax.random.split(key, 4)
    gamma = 1.0 + 0.1 * jax.random.normal(k1, (c,), dtype=jnp.float32)
    beta = 0.1 * jax.random.normal(k2, (c,), dtype=jnp.float32)
    mean = 0.1 * jax.random.normal(k3, (c,), dtype=jnp.float32)
    var = 1.0 + 0.1 * jnp.abs(jax.random.normal(k4, (c,), dtype=jnp.float32))
    return (gamma, beta, mean, var)


def init_resnet18_params(key, in_channels):
    keys = iter(jax.random.split(key, 128))
    params = {
        "conv1_w": _init_conv(next(keys), 64, in_channels, 7),
        "bn1": _init_bn(next(keys), 64),
    }
    cfg = [(64, 64, 1), (64, 128, 2), (128, 256, 2), (256, 512, 2)]
    layers = []
    for cin, cout, stride in cfg:
        blocks = []
        for b in range(2):
            s = stride if b == 0 else 1
            bcin = cin if b == 0 else cout
            blk = {
                "stride": s,
                "conv1_w": _init_conv(next(keys), cout, bcin, 3),
                "bn1": _init_bn(next(keys), cout),
                "conv2_w": _init_conv(next(keys), cout, cout, 3),
                "bn2": _init_bn(next(keys), cout),
            }
            if s != 1 or bcin != cout:
                blk["down_w"] = _init_conv(next(keys), cout, bcin, 1)
                blk["down_bn"] = _init_bn(next(keys), cout)
            blocks.append(blk)
        layers.append(blocks)
    params["layers"] = layers
    params["fc_w"] = jax.random.normal(next(keys), (1, 512), dtype=jnp.float32) / (512.0 ** 0.5)
    params["fc_b"] = 0.01 * jax.random.normal(next(keys), (1,), dtype=jnp.float32)
    return params


if __name__ == "__main__":
    key = jax.random.PRNGKey(0)
    pkey, xkey = jax.random.split(key)
    in_channels = 4
    params = init_resnet18_params(pkey, in_channels)
    x = jax.random.normal(xkey, (2, in_channels, 16, 16), dtype=jnp.float32)  # NCHW
    y = slice25dcnn_forward(params, x)
    y = jax.block_until_ready(y)
    assert y.shape == (2,), y.shape
    assert bool(jnp.all(jnp.isfinite(y)))
    print("KERNEL_OK")
</pallas_src>

<mosaic_0001>
module attributes {stable_mosaic.version = 11 : i64} {
  func.func @_matmul_affine_kernel(%arg0: i32, %arg1: i32, %arg2: i32, %arg3: memref<128x256xbf16, #tpu.memory_space<vmem>>, %arg4: memref<256x128xbf16, #tpu.memory_space<vmem>>, %arg5: memref<1x128xf32, #tpu.memory_space<vmem>>, %arg6: memref<1x128xf32, #tpu.memory_space<vmem>>, %arg7: memref<128x128xbf16, #tpu.memory_space<vmem>>, %arg8: memref<128x128xf32, #tpu.memory_space<vmem>>) attributes {dimension_semantics = [#tpu.dimension_semantics<parallel>, #tpu.dimension_semantics<parallel>, #tpu.dimension_semantics<arbitrary>], iteration_bounds = array<i64: 1, 1, 1>, scalar_prefetch = 0 : i64, scratch_operands = 1 : i64, tpu.core_type = #tpu.core_type<tc>, window_params = [{transform_indices = @transform_0, window_bounds = array<i64: 128, 256>}, {transform_indices = @transform_1, window_bounds = array<i64: 256, 128>}, {transform_indices = @transform_2, window_bounds = array<i64: 1, 128>}, {transform_indices = @transform_3, window_bounds = array<i64: 1, 128>}, {transform_indices = @transform_4, window_bounds = array<i64: 128, 128>}]} {
    %c0_i32 = arith.constant 0 : i32
    %0 = arith.cmpi eq, %arg2, %c0_i32 : i32
    %1 = arith.extui %0 : i1 to i32
    %c0_i32_0 = arith.constant 0 : i32
    %2 = arith.cmpi ne, %1, %c0_i32_0 : i32
    scf.if %2 {
      %cst_10 = arith.constant 0.000000e+00 : f32
      %12 = vector.broadcast %cst_10 : f32 to vector<128x128xf32>
      %c0_11 = arith.constant 0 : index
      %c0_12 = arith.constant 0 : index
      %13 = vector.load %arg8[%c0_11, %c0_12] : memref<128x128xf32, #tpu.memory_space<vmem>>, vector<128x128xf32>
      tpu.vector_store %arg8[%c0_11, %c0_12], %12 {strides = array<i32>} : memref<128x128xf32, #tpu.memory_space<vmem>>, vector<128x128xf32>,
    } else {
    }
    %c0 = arith.constant 0 : index
    %c0_1 = arith.constant 0 : index
    %3 = vector.load %arg8[%c0, %c0_1] : memref<128x128xf32, #tpu.memory_space<vmem>>, vector<128x128xf32>
    %c0_2 = arith.constant 0 : index
    %c0_3 = arith.constant 0 : index
    %4 = vector.load %arg3[%c0_2, %c0_3] : memref<128x256xbf16, #tpu.memory_space<vmem>>, vector<128x256xbf16>
    %c0_4 = arith.constant 0 : index
    %c0_5 = arith.constant 0 : index
    %5 = vector.load %arg4[%c0_4, %c0_5] : memref<256x128xbf16, #tpu.memory_space<vmem>>, vector<256x128xbf16>
    %cst = arith.constant dense<0.000000e+00> : vector<128x128xf32>
    %6 = tpu.matmul %4, %5, %cst {dimension_numbers = #tpu.dot_dimension_numbers<[1], [0], [0], [1], [0, 0, 1, 1], [], []>} : vector<128x256xbf16>, vector<256x128xbf16>, vector<128x128xf32> -> vector<128x128xf32>
    %7 = arith.addf %3, %6 : vector<128x128xf32>
    %c0_6 = arith.constant 0 : index
    %c0_7 = arith.constant 0 : index
    %8 = vector.load %arg8[%c0_6, %c0_7] : memref<128x128xf32, #tpu.memory_space<vmem>>, vector<128x128xf32>
    tpu.vector_store %arg8[%c0_6, %c0_7], %7 {strides = array<i32>} : memref<128x128xf32, #tpu.memory_space<vmem>>, vector<128x128xf32>,
    %c0_i32_8 = arith.constant 0 : i32
    %9 = arith.cmpi eq, %arg2, %c0_i32_8 : i32
    %10 = arith.extui %9 : i1 to i32
    %c0_i32_9 = arith.constant 0 : i32
    %11 = arith.cmpi ne, %10, %c0_i32_9 : i32
    scf.if %11 {
      %c0_10 = arith.constant 0 : index
      %c0_11 = arith.constant 0 : index
      %12 = vector.load %arg8[%c0_10, %c0_11] : memref<128x128xf32, #tpu.memory_space<vmem>>, vector<128x128xf32>
      %c0_12 = arith.constant 0 : index
      %c0_13 = arith.constant 0 : index
      %13 = vector.load %arg5[%c0_12, %c0_13] : memref<1x128xf32, #tpu.memory_space<vmem>>, vector<1x128xf32>
      %14 = vector.broadcast %13 : vector<1x128xf32> to vector<128x128xf32>
      %15 = arith.mulf %12, %14 : vector<128x128xf32>
      %c0_14 = arith.constant 0 : index
      %c0_15 = arith.constant 0 : index
      %16 = vector.load %arg6[%c0_14, %c0_15] : memref<1x128xf32, #tpu.memory_space<vmem>>, vector<1x128xf32>
      %17 = vector.broadcast %16 : vector<1x128xf32> to vector<128x128xf32>
      %18 = arith.addf %15, %17 : vector<128x128xf32>
      %cst_16 = arith.constant 0.000000e+00 : f32
      %19 = vector.broadcast %cst_16 : f32 to vector<128x128xf32>
      %20 = arith.maximumf %18, %19 : vector<128x128xf32>
      %21 = arith.truncf %20 : vector<128x128xf32> to vector<128x128xbf16>
      %c0_17 = arith.constant 0 : index
      %c0_18 = arith.constant 0 : index
      %22 = vector.load %arg7[%c0_17, %c0_18] : memref<128x128xbf16, #tpu.memory_space<vmem>>, vector<128x128xbf16>
      tpu.vector_store %arg7[%c0_17, %c0_18], %21 {strides = array<i32>} : memref<128x128xbf16, #tpu.memory_space<vmem>>, vector<128x128xbf16>,
    } else {
    }
    return
  }
  func.func @transform_0(%arg0: i32, %arg1: i32, %arg2: i32) -> (i32, i32) {
    %c0_i32 = arith.constant 0 : i32
    return %arg0, %arg2 : i32, i32
  }
  func.func @transform_1(%arg0: i32, %arg1: i32, %arg2: i32) -> (i32, i32) {
    %c0_i32 = arith.constant 0 : i32
    return %arg2, %arg1 : i32, i32
  }
  func.func @transform_2(%arg0: i32, %arg1: i32, %arg2: i32) -> (i32, i32) {
    %c0_i32 = arith.constant 0 : i32
    %c0_i32_0 = arith.constant 0 : i32
    return %c0_i32, %arg1 : i32, i32
  }
  func.func @transform_3(%arg0: i32, %arg1: i32, %arg2: i32) -> (i32, i32) {
    %c0_i32 = arith.constant 0 : i32
    %c0_i32_0 = arith.constant 0 : i32
    return %c0_i32, %arg1 : i32, i32
  }
  func.func @transform_4(%arg0: i32, %arg1: i32, %arg2: i32) -> (i32, i32) {
    %c0_i32 = arith.constant 0 : i32
    return %arg0, %arg1 : i32, i32
  }
}

</mosaic_0001>

<llo_original>
// kernel: tpu_custom_call.1
$region0: #{tpu_custom_call.1}
  #allocation0 [shape = 'u32[]', space=smem, size = 0x4, offset = 0x4, fixed_abs, tag = 'smem constant byte address 0x4 - core index']
  #allocation1 [shape = 'u32[72,128]{1,0:T(1,128)}', space=vmem, size = 0x9000, scoped, tag = 'internal scratch']
  #allocation2 [shape = 'f32[128,128]{1,0:T(8,128)}', space=vmem, size = 0x10000, scoped, tag = 'scratch operand']
  %s0 = inlined_call_operand.hbm [shape: bf16[128,256], index: 0, kind: input, shape index: {}]
  %s1 = inlined_call_operand.hbm [shape: bf16[256,128], index: 1, kind: input, shape index: {}]
  %s2 = inlined_call_operand.vmem [shape: f32[1,128], index: 2, kind: input, shape index: {}]
  %s3 = inlined_call_operand.vmem [shape: f32[1,128], index: 3, kind: input, shape index: {}]
  %s4 = inlined_call_operand.hbm [shape: bf16[128,128], index: 4, kind: output, shape index: {}]
  %s5 = sld [smem:[#allocation0]]
  $region42: #{tpu_custom_call.1} parent=0
    _
  %s7 = ssub.s32 1, %s5
  %s8 = scalar_select 0, %s7, %s5
  $region1: #{tpu_custom_call.1} parent=0
    #allocation3 [shape = 'u8[65536]{0}', space=vmem, size = 0x10000, scoped, tag = 'input window, operand 0, single buffered']
    #allocation4 [shape = 's32[1]{0}', space=sflag, size = 0x4, scoped, tag = 'scoped memory for tpu_custom_call.1']
    #allocation5 [shape = 's32[1]{0}', space=sflag, size = 0x4, scoped, tag = 'scoped memory for tpu_custom_call.1']
    #allocation6 [shape = 'u8[65536]{0}', space=vmem, size = 0x10000, scoped, tag = 'input window, operand 1, single buffered']
    #allocation7 [shape = 's32[1]{0}', space=sflag, size = 0x4, scoped, tag = 'scoped memory for tpu_custom_call.1']
    #allocation8 [shape = 'u8[32768]{0}', space=vmem, size = 0x8000, scoped, tag = 'output window, operand 0, single buffered']
    %9 = vsyncpa [#allocation4], 0
    %10 = vsyncpa [#allocation7], 0
    %11 = vsyncpa [#allocation5], 0
    // Predicated region
    $region2: #{tpu_custom_call.1} parent=1 // pred_check
      _
    $region3: #{tpu_custom_call.1} parent=1 // pred_check_branch
      %13 = sbr.rel (0) target = $region5
    $region4: #{tpu_custom_call.1} parent=1 // pred_region
      %15 = vsyncadd [#allocation4], 0
      %s16 = sshll.u32 %s0, 4
      %s17 = int_to_ptr.hbm [resolvable:$true] %s16
      %s18 = sshll.u32 [#allocation3], 4
      %s19 = int_to_ptr.vmem [resolvable:$true] %s18
      %24 = dma.hbm_to_vmem [thread:$0]  %s17, 2048, %s19, [#allocation4], 128, 128, 8
    $region5: #{tpu_custom_call.1} parent=1 // pred_fallthru
      _
    // Predicated region
    $region6: #{tpu_custom_call.1} parent=1 // pred_check
      _
    $region7: #{tpu_custom_call.1} parent=1 // pred_check_branch
      %26 = sbr.rel (0) target = $region9
    $region8: #{tpu_custom_call.1} parent=1 // pred_region
      %28 = vsyncadd [#allocation7], 0
      %s29 = sshll.u32 %s1, 4
      %s30 = int_to_ptr.hbm [resolvable:$true] %s29
      %s31 = sshll.u32 [#allocation6], 4
      %s32 = int_to_ptr.vmem [resolvable:$true] %s31
      %37 = dma.hbm_to_vmem [thread:$0]  %s30, 2048, %s32, [#allocation7], 64, 64, 4
    $region9: #{tpu_custom_call.1} parent=1 // pred_fallthru
      _
    // Predicated region
    $region10: #{tpu_custom_call.1} parent=1 // pred_check
      _
    $region11: #{tpu_custom_call.1} parent=1 // pred_check_branch
      %39 = sbr.rel (0) target = $region13
    $region12: #{tpu_custom_call.1} parent=1 // pred_region
      _
    $region13: #{tpu_custom_call.1} parent=1 // pred_fallthru
      _
    // Predicated region
    $region14: #{tpu_custom_call.1} parent=1 // pred_check
      _
    $region15: #{tpu_custom_call.1} parent=1 // pred_check_branch
      %41 = sbr.rel (0) target = $region17
    $region16: #{tpu_custom_call.1} parent=1 // pred_region
      _
    $region17: #{tpu_custom_call.1} parent=1 // pred_fallthru
      _
    // Predicated region
    $region18: #{tpu_custom_call.1} parent=1 // pred_check
      _
    $region19: #{tpu_custom_call.1} parent=1 // pred_check_branch
      %43 = sbr.rel (0) target = $region21
    $region20: #{tpu_custom_call.1} parent=1 // pred_region
      %45 = dma.done [#allocation4], 2048
    $region21: #{tpu_custom_call.1} parent=1 // pred_fallthru
      _
    // Predicated region
    $region22: #{tpu_custom_call.1} parent=1 // pred_check
      _
    $region23: #{tpu_custom_call.1} parent=1 // pred_check_branch
      %47 = sbr.rel (0) target = $region25
    $region24: #{tpu_custom_call.1} parent=1 // pred_region
      %49 = dma.done [#allocation7], 2048
    $region25: #{tpu_custom_call.1} parent=1 // pred_fallthru
      _
    %p50 = scmp.eq.s32.totalorder 0, 0
    // Predicated region
    $region26: #{tpu_custom_call.1} parent=1 // pred_check
      %p51 = pneg %p50
    $region27: #{tpu_custom_call.1} parent=1 // pred_check_branch
      %53 = sbr.rel (%p51) target = $region29
    $region28: #{tpu_custom_call.1} parent=1 // pred_region
      %54 = vst [vmem:[#allocation2] sm:$0xff] 0.0
      %55 = vst [vmem:[#allocation2 + $0x8] sm:$0xff] 0.0
      %56 = vst [vmem:[#allocation2 + $0x10] sm:$0xff] 0.0
      %57 = vst [vmem:[#allocation2 + $0x18] sm:$0xff] 0.0
      %58 = vst [vmem:[#allocation2 + $0x20] sm:$0xff] 0.0
      %59 = vst [vmem:[#allocation2 + $0x28] sm:$0xff] 0.0
      %60 = vst [vmem:[#allocation2 + $0x30] sm:$0xff] 0.0
      %61 = vst [vmem:[#allocation2 + $0x38] sm:$0xff] 0.0
      %62 = vst [vmem:[#allocation2 + $0x40] sm:$0xff] 0.0
      %63 = vst [vmem:[#allocation2 + $0x48] sm:$0xff] 0.0
      %64 = vst [vmem:[#allocation2 + $0x50] sm:$0xff] 0.0
      %65 = vst [vmem:[#allocation2 + $0x58] sm:$0xff] 0.0
      %66 = vst [vmem:[#allocation2 + $0x60] sm:$0xff] 0.0
      %67 = vst [vmem:[#allocation2 + $0x68] sm:$0xff] 0.0
      %68 = vst [vmem:[#allocation2 + $0x70] sm:$0xff] 0.0
      %69 = vst [vmem:[#allocation2 + $0x78] sm:$0xff] 0.0
    $region29: #{tpu_custom_call.1} parent=1 // pred_fallthru
      _
    %v70 = vld [vmem:[#allocation2] sm:$0xff]
    %v71 = vld [vmem:[#allocation2 + $0x8] sm:$0xff]
    %v72 = vld [vmem:[#allocation2 + $0x10] sm:$0xff]
    %v73 = vld [vmem:[#allocation2 + $0x18] sm:$0xff]
    %v74 = vld [vmem:[#allocation2 + $0x20] sm:$0xff]
    %v75 = vld [vmem:[#allocation2 + $0x28] sm:$0xff]
    %v76 = vld [vmem:[#allocation2 + $0x30] sm:$0xff]
    %v77 = vld [vmem:[#allocation2 + $0x38] sm:$0xff]
    %v78 = vld [vmem:[#allocation2 + $0x40] sm:$0xff]
    %v79 = vld [vmem:[#allocation2 + $0x48] sm:$0xff]
    %v80 = vld [vmem:[#allocation2 + $0x50] sm:$0xff]
    %v81 = vld [vmem:[#allocation2 + $0x58] sm:$0xff]
    %v82 = vld [vmem:[#allocation2 + $0x60] sm:$0xff]
    %v83 = vld [vmem:[#allocation2 + $0x68] sm:$0xff]
    %v84 = vld [vmem:[#allocation2 + $0x70] sm:$0xff]
    %v85 = vld [vmem:[#allocation2 + $0x78] sm:$0xff]
    %v86 = vld [vmem:[#allocation3] sm:$0xff]
    %v87 = vld [vmem:[#allocation3 + $0x8] sm:$0xff]
    %v88 = vld [vmem:[#allocation3 + $0x10] sm:$0xff]
    %v89 = vld [vmem:[#allocation3 + $0x18] sm:$0xff]
    %v90 = vld [vmem:[#allocation3 + $0x20] sm:$0xff]
    %v91 = vld [vmem:[#allocation3 + $0x28] sm:$0xff]
    %v92 = vld [vmem:[#allocation3 + $0x30] sm:$0xff]
    %v93 = vld [vmem:[#allocation3 + $0x38] sm:$0xff]
    %v94 = vld [vmem:[#allocation3 + $0x40] sm:$0xff]
    %v95 = vld [vmem:[#allocation3 + $0x48] sm:$0xff]
    %v96 = vld [vmem:[#allocation3 + $0x50] sm:$0xff]
    %v97 = vld [vmem:[#allocation3 + $0x58] sm:$0xff]
    %v98 = vld [vmem:[#allocation3 + $0x60] sm:$0xff]
    %v99 = vld [vmem:[#allocation3 + $0x68] sm:$0xff]
    %v100 = vld [vmem:[#allocation3 + $0x70] sm:$0xff]
    %v101 = vld [vmem:[#allocation3 + $0x78] sm:$0xff]
    %v102 = vld [vmem:[#allocation6] sm:$0xf]
    %v103 = vld [vmem:[#allocation6 + $0x4] sm:$0xf]
    %v104 = vld [vmem:[#allocation6 + $0x8] sm:$0xf]
    %v105 = vld [vmem:[#allocation6 + $0xc] sm:$0xf]
    %v106 = vld [vmem:[#allocation6 + $0x10] sm:$0xf]
    %v107 = vld [vmem:[#allocation6 + $0x14] sm:$0xf]
    %v108 = vld [vmem:[#allocation6 + $0x18] sm:$0xf]
    %v109 = vld [vmem:[#allocation6 + $0x1c] sm:$0xf]
    %v110 = vld [vmem:[#allocation6 + $0x20] sm:$0xf]
    %v111 = vld [vmem:[#allocation6 + $0x24] sm:$0xf]
    %v112 = vld [vmem:[#allocation6 + $0x28] sm:$0xf]
    %v113 = vld [vmem:[#allocation6 + $0x2c] sm:$0xf]
    %v114 = vld [vmem:[#allocation6 + $0x30] sm:$0xf]
    %v115 = vld [vmem:[#allocation6 + $0x34] sm:$0xf]
    %v116 = vld [vmem:[#allocation6 + $0x38] sm:$0xf]
    %v117 = vld [vmem:[#allocation6 + $0x3c] sm:$0xf]
    %v118 = vld [vmem:[#allocation6 + $0x40] sm:$0xf]
    %v119 = vld [vmem:[#allocation6 + $0x44] sm:$0xf]
    %v120 = vld [vmem:[#allocation6 + $0x48] sm:$0xf]
    %v121 = vld [vmem:[#allocation6 + $0x4c] sm:$0xf]
    %v122 = vld [vmem:[#allocation6 + $0x50] sm:$0xf]
    %v123 = vld [vmem:[#allocation6 + $0x54] sm:$0xf]
    %v124 = vld [vmem:[#allocation6 + $0x58] sm:$0xf]
    %v125 = vld [vmem:[#allocation6 + $0x5c] sm:$0xf]
    %v126 = vld [vmem:[#allocation6 + $0x60] sm:$0xf]
    %v127 = vld [vmem:[#allocation6 + $0x64] sm:$0xf]
    %v128 = vld [vmem:[#allocation6 + $0x68] sm:$0xf]
    %v129 = vld [vmem:[#allocation6 + $0x6c] sm:$0xf]
    %v130 = vld [vmem:[#allocation6 + $0x70] sm:$0xf]
    %v131 = vld [vmem:[#allocation6 + $0x74] sm:$0xf]
    %v132 = vld [vmem:[#allocation6 + $0x78] sm:$0xf]
    %v133 = vld [vmem:[#allocation6 + $0x7c] sm:$0xf]
    %v150 = vunpack.c.l.b16 %v86
    %v151 = vunpack.c.h.b16 %v86
    %v152 = vunpack.c.l.b16 %v87
    %v153 = vunpack.c.h.b16 %v87
    %v154 = vunpack.c.l.b16 %v88
    %v155 = vunpack.c.h.b16 %v88
    %v156 = vunpack.c.l.b16 %v89
    %v157 = vunpack.c.h.b16 %v89
    %v158 = vunpack.c.l.b16 %v90
    %v159 = vunpack.c.h.b16 %v90
    %v160 = vunpack.c.l.b16 %v91
    %v161 = vunpack.c.h.b16 %v91
    %v162 = vunpack.c.l.b16 %v92
    %v163 = vunpack.c.h.b16 %v92
    %v164 = vunpack.c.l.b16 %v93
    %v165 = vunpack.c.h.b16 %v93
    %v166 = vunpack.c.l.b16 %v94
    %v167 = vunpack.c.h.b16 %v94
    %v168 = vunpack.c.l.b16 %v95
    %v169 = vunpack.c.h.b16 %v95
    %v170 = vunpack.c.l.b16 %v96
    %v171 = vunpack.c.h.b16 %v96
    %v172 = vunpack.c.l.b16 %v97
    %v173 = vunpack.c.h.b16 %v97
    %v174 = vunpack.c.l.b16 %v98
    %v175 = vunpack.c.h.b16 %v98
    %v176 = vunpack.c.l.b16 %v99
    %v177 = vunpack.c.h.b16 %v99
    %v178 = vunpack.c.l.b16 %v100
    %v179 = vunpack.c.h.b16 %v100
    %v180 = vunpack.c.l.b16 %v101
    %v181 = vunpack.c.h.b16 %v101
    %v182 = vpack.c.b16 %v152, %v150
    %v183 = vpack.c.b16 %v153, %v151
    %v184 = vpack.c.b16 %v156, %v154
    %v185 = vpack.c.b16 %v157, %v155
    %v186 = vpack.c.b16 %v160, %v158
    %v187 = vpack.c.b16 %v161, %v159
    %v188 = vpack.c.b16 %v164, %v162
    %v189 = vpack.c.b16 %v165, %v163
    %v190 = vpack.c.b16 %v168, %v166
    %v191 = vpack.c.b16 %v169, %v167
    %v192 = vpack.c.b16 %v172, %v170
    %v193 = vpack.c.b16 %v173, %v171
    %v194 = vpack.c.b16 %v176, %v174
    %v195 = vpack.c.b16 %v177, %v175
    %v196 = vpack.c.b16 %v180, %v178
    %v197 = vpack.c.b16 %v181, %v179
    %v246 = vunpack.c.l.b16 %v102
    %v247 = vunpack.c.l.b16 %v103
    %v248 = vunpack.c.l.b16 %v104
    %v249 = vunpack.c.l.b16 %v105
    %v250 = vunpack.c.l.b16 %v106
    %v251 = vunpack.c.l.b16 %v107
    %v252 = vunpack.c.l.b16 %v108
    %v253 = vunpack.c.l.b16 %v109
    %v254 = vunpack.c.l.b16 %v110
    %v255 = vunpack.c.l.b16 %v111
    %v256 = vunpack.c.l.b16 %v112
    %v257 = vunpack.c.l.b16 %v113
    %v258 = vunpack.c.l.b16 %v114
    %v259 = vunpack.c.l.b16 %v115
    %v260 = vunpack.c.l.b16 %v116
    %v261 = vunpack.c.l.b16 %v117
    %v262 = vunpack.c.l.b16 %v118
    %v263 = vunpack.c.l.b16 %v119
    %v264 = vunpack.c.l.b16 %v120
    %v265 = vunpack.c.l.b16 %v121
    %v266 = vunpack.c.l.b16 %v122
    %v267 = vunpack.c.l.b16 %v123
    %v268 = vunpack.c.l.b16 %v124
    %v269 = vunpack.c.l.b16 %v125
    %v270 = vunpack.c.l.b16 %v126
    %v271 = vunpack.c.l.b16 %v127
    %v272 = vunpack.c.l.b16 %v128
    %v273 = vunpack.c.l.b16 %v129
    %v274 = vunpack.c.l.b16 %v130
    %v275 = vunpack.c.l.b16 %v131
    %v276 = vunpack.c.l.b16 %v132
    %v277 = vunpack.c.l.b16 %v133
    %v278 = vpack.c.b16 %v247, %v246
    %v279 = vpack.c.b16 %v249, %v248
    %v280 = vpack.c.b16 %v251, %v250
    %v281 = vpack.c.b16 %v253, %v252
    %v282 = vpack.c.b16 %v255, %v254
    %v283 = vpack.c.b16 %v257, %v256
    %v284 = vpack.c.b16 %v259, %v258
    %v285 = vpack.c.b16 %v261, %v260
    %v286 = vpack.c.b16 %v263, %v262
    %v287 = vpack.c.b16 %v265, %v264
    %v288 = vpack.c.b16 %v267, %v266
    %v289 = vpack.c.b16 %v269, %v268
    %v290 = vpack.c.b16 %v271, %v270
    %v291 = vpack.c.b16 %v273, %v272
    %v292 = vpack.c.b16 %v275, %v274
    %v293 = vpack.c.b16 %v277, %v276
    %310 = vmatpush.bf16.msra.mxu0 %v285
    %311 = vmatpush.bf16.msra.mxu0 %v284
    %312 = vmatpush.bf16.msra.mxu0 %v283
    %313 = vmatpush.bf16.msra.mxu0 %v282
    %314 = vmatpush.bf16.msra.mxu0 %v281
    %315 = vmatpush.bf16.msra.mxu0 %v280
    %316 = vmatpush.bf16.msra.mxu0 %v279
    %317 = vmatpush.bf16.msra.mxu0 %v278
    %318 = vmatmul.bf16.gmra.mxu0 %v182
    %v319 = vpop.f32.mrf.mxu0
    %v320 = vadd.f32 0.0, %v319
    %v321 = vpop.f32.mrf.mxu0
    %v322 = vadd.f32 0.0, %v321
    %323 = vmatmul.bf16.gmra.mxu0 %v184
    %v324 = vpop.f32.mrf.mxu0
    %v325 = vadd.f32 0.0, %v324
    %v326 = vpop.f32.mrf.mxu0
    %v327 = vadd.f32 0.0, %v326
    %328 = vmatmul.bf16.gmra.mxu0 %v186
    %v329 = vpop.f32.mrf.mxu0
    %v330 = vadd.f32 0.0, %v329
    %v331 = vpop.f32.mrf.mxu0
    %v332 = vadd.f32 0.0, %v331
    %333 = vmatmul.bf16.gmra.mxu0 %v188
    %v334 = vpop.f32.mrf.mxu0
    %v335 = vadd.f32 0.0, %v334
    %v336 = vpop.f32.mrf.mxu0
    %v337 = vadd.f32 0.0, %v336
    %338 = vmatmul.bf16.gmra.mxu0 %v190
    %v339 = vpop.f32.mrf.mxu0
    %v340 = vadd.f32 0.0, %v339
    %v341 = vpop.f32.mrf.mxu0
    %v342 = vadd.f32 0.0, %v341
    %343 = vmatmul.bf16.gmra.mxu0 %v192
    %v344 = vpop.f32.mrf.mxu0
    %v345 = vadd.f32 0.0, %v344
    %v346 = vpop.f32.mrf.mxu0
    %v347 = vadd.f32 0.0, %v346
    %348 = vmatmul.bf16.gmra.mxu0 %v194
    %v349 = vpop.f32.mrf.mxu0
    %v350 = vadd.f32 0.0, %v349
    %v351 = vpop.f32.mrf.mxu0
    %v352 = vadd.f32 0.0, %v351
    %353 = vmatmul.bf16.gmra.mxu0 %v196
    %v354 = vpop.f32.mrf.mxu0
    %v355 = vadd.f32 0.0, %v354
    %v356 = vpop.f32.mrf.mxu0
    %v357 = vadd.f32 0.0, %v356
    %358 = vdwg.mxu0
    %359 = vmatpush.bf16.msra.mxu0 %v293
    %360 = vmatpush.bf16.msra.mxu0 %v292
    %361 = vmatpush.bf16.msra.mxu0 %v291
    %362 = vmatpush.bf16.msra.mxu0 %v290
    %363 = vmatpush.bf16.msra.mxu0 %v289
    %364 = vmatpush.bf16.msra.mxu0 %v288
    %365 = vmatpush.bf16.msra.mxu0 %v287
    %366 = vmatpush.bf16.msra.mxu0 %v286
    %367 = vmatmul.bf16.gmra.mxu0 %v183
    %v368 = vpop.f32.mrf.mxu0
    %v369 = vadd.f32 %v320, %v368
    %v370 = vpop.f32.mrf.mxu0
    %v371 = vadd.f32 %v322, %v370
    %372 = vmatmul.bf16.gmra.mxu0 %v185
    %v373 = vpop.f32.mrf.mxu0
    %v374 = vadd.f32 %v325, %v373
    %v375 = vpop.f32.mrf.mxu0
    %v376 = vadd.f32 %v327, %v375
    %377 = vmatmul.bf16.gmra.mxu0 %v187
    %v378 = vpop.f32.mrf.mxu0
    %v379 = vadd.f32 %v330, %v378
    %v380 = vpop.f32.mrf.mxu0
    %v381 = vadd.f32 %v332, %v380
    %382 = vmatmul.bf16.gmra.mxu0 %v189
    %v383 = vpop.f32.mrf.mxu0
    %v384 = vadd.f32 %v335, %v383
    %v385 = vpop.f32.mrf.mxu0
    %v386 = vadd.f32 %v337, %v385
    %387 = vmatmul.bf16.gmra.mxu0 %v191
    %v388 = vpop.f32.mrf.mxu0
    %v389 = vadd.f32 %v340, %v388
    %v390 = vpop.f32.mrf.mxu0
    %v391 = vadd.f32 %v342, %v390
    %392 = vmatmul.bf16.gmra.mxu0 %v193
    %v393 = vpop.f32.mrf.mxu0
    %v394 = vadd.f32 %v345, %v393
    %v395 = vpop.f32.mrf.mxu0
    %v396 = vadd.f32 %v347, %v395
    %397 = vmatmul.bf16.gmra.mxu0 %v195
    %v398 = vpop.f32.mrf.mxu0
    %v399 = vadd.f32 %v350, %v398
    %v400 = vpop.f32.mrf.mxu0
    %v401 = vadd.f32 %v352, %v400
    %402 = vmatmul.bf16.gmra.mxu0 %v197
    %v403 = vpop.f32.mrf.mxu0
    %v404 = vadd.f32 %v355, %v403
    %v405 = vpop.f32.mrf.mxu0
    %v406 = vadd.f32 %v357, %v405
    %407 = vdwg.mxu0
    %v408 = vadd.f32 %v70, %v369
    %v409 = vadd.f32 %v71, %v371
    %v410 = vadd.f32 %v72, %v374
    %v411 = vadd.f32 %v73, %v376
    %v412 = vadd.f32 %v74, %v379
    %v413 = vadd.f32 %v75, %v381
    %v414 = vadd.f32 %v76, %v384
    %v415 = vadd.f32 %v77, %v386
    %v416 = vadd.f32 %v78, %v389
    %v417 = vadd.f32 %v79, %v391
    %v418 = vadd.f32 %v80, %v394
    %v419 = vadd.f32 %v81, %v396
    %v420 = vadd.f32 %v82, %v399
    %v421 = vadd.f32 %v83, %v401
    %v422 = vadd.f32 %v84, %v404
    %v423 = vadd.f32 %v85, %v406
    %424 = vst [vmem:[#allocation2] sm:$0xff] %v408
    %425 = vst [vmem:[#allocation2 + $0x8] sm:$0xff] %v409
    %426 = vst [vmem:[#allocation2 + $0x10] sm:$0xff] %v410
    %427 = vst [vmem:[#allocation2 + $0x18] sm:$0xff] %v411
    %428 = vst [vmem:[#allocation2 + $0x20] sm:$0xff] %v412
    %429 = vst [vmem:[#allocation2 + $0x28] sm:$0xff] %v413
    %430 = vst [vmem:[#allocation2 + $0x30] sm:$0xff] %v414
    %431 = vst [vmem:[#allocation2 + $0x38] sm:$0xff] %v415
    %432 = vst [vmem:[#allocation2 + $0x40] sm:$0xff] %v416
    %433 = vst [vmem:[#allocation2 + $0x48] sm:$0xff] %v417
    %434 = vst [vmem:[#allocation2 + $0x50] sm:$0xff] %v418
    %435 = vst [vmem:[#allocation2 + $0x58] sm:$0xff] %v419
    %436 = vst [vmem:[#allocation2 + $0x60] sm:$0xff] %v420
    %437 = vst [vmem:[#allocation2 + $0x68] sm:$0xff] %v421
    %438 = vst [vmem:[#allocation2 + $0x70] sm:$0xff] %v422
    %439 = vst [vmem:[#allocation2 + $0x78] sm:$0xff] %v423
    // Predicated region
    $region30: #{tpu_custom_call.1} parent=1 // pred_check
      %p440 = pneg %p50
    $region31: #{tpu_custom_call.1} parent=1 // pred_check_branch
      %442 = sbr.rel (%p440) target = $region33
    $region32: #{tpu_custom_call.1} parent=1 // pred_region
      %v443 = vld [vmem:[#allocation2] sm:$0xff]
      %v444 = vld [vmem:[#allocation2 + $0x8] sm:$0xff]
      %v445 = vld [vmem:[#allocation2 + $0x10] sm:$0xff]
      %v446 = vld [vmem:[#allocation2 + $0x18] sm:$0xff]
      %v447 = vld [vmem:[#allocation2 + $0x20] sm:$0xff]
      %v448 = vld [vmem:[#allocation2 + $0x28] sm:$0xff]
      %v449 = vld [vmem:[#allocation2 + $0x30] sm:$0xff]
      %v450 = vld [vmem:[#allocation2 + $0x38] sm:$0xff]
      %v451 = vld [vmem:[#allocation2 + $0x40] sm:$0xff]
      %v452 = vld [vmem:[#allocation2 + $0x48] sm:$0xff]
      %v453 = vld [vmem:[#allocation2 + $0x50] sm:$0xff]
      %v454 = vld [vmem:[#allocation2 + $0x58] sm:$0xff]
      %v455 = vld [vmem:[#allocation2 + $0x60] sm:$0xff]
      %v456 = vld [vmem:[#allocation2 + $0x68] sm:$0xff]
      %v457 = vld [vmem:[#allocation2 + $0x70] sm:$0xff]
      %v458 = vld [vmem:[#allocation2 + $0x78] sm:$0xff]
      %v459 = vld [vmem:[%s2] sm:$0x1]
      %v461 = vperm.slane %v459, 0
      %v463 = vmul.f32 %v443, %v461
      %v464 = vmul.f32 %v444, %v461
      %v465 = vmul.f32 %v445, %v461
      %v466 = vmul.f32 %v446, %v461
      %v467 = vmul.f32 %v447, %v461
      %v468 = vmul.f32 %v448, %v461
      %v469 = vmul.f32 %v449, %v461
      %v470 = vmul.f32 %v450, %v461
      %v471 = vmul.f32 %v451, %v461
      %v472 = vmul.f32 %v452, %v461
      %v473 = vmul.f32 %v453, %v461
      %v474 = vmul.f32 %v454, %v461
      %v475 = vmul.f32 %v455, %v461
      %v476 = vmul.f32 %v456, %v461
      %v477 = vmul.f32 %v457, %v461
      %v478 = vmul.f32 %v458, %v461
      %v479 = vld [vmem:[%s3] sm:$0x1]
      %v481 = vperm.slane %v479, 0
      %v483 = vadd.f32 %v463, %v481
      %v484 = vadd.f32 %v464, %v481
      %v485 = vadd.f32 %v465, %v481
      %v486 = vadd.f32 %v466, %v481
      %v487 = vadd.f32 %v467, %v481
      %v488 = vadd.f32 %v468, %v481
      %v489 = vadd.f32 %v469, %v481
      %v490 = vadd.f32 %v470, %v481
      %v491 = vadd.f32 %v471, %v481
      %v492 = vadd.f32 %v472, %v481
      %v493 = vadd.f32 %v473, %v481
      %v494 = vadd.f32 %v474, %v481
      %v495 = vadd.f32 %v475, %v481
      %v496 = vadd.f32 %v476, %v481
      %v497 = vadd.f32 %v477, %v481
      %v498 = vadd.f32 %v478, %v481
      %v499 = vmax.f32 %v483, 0.0
      %v500 = vmax.f32 %v484, 0.0
      %v501 = vmax.f32 %v485, 0.0
      %v502 = vmax.f32 %v486, 0.0
      %v503 = vmax.f32 %v487, 0.0
      %v504 = vmax.f32 %v488, 0.0
      %v505 = vmax.f32 %v489, 0.0
      %v506 = vmax.f32 %v490, 0.0
      %v507 = vmax.f32 %v491, 0.0
      %v508 = vmax.f32 %v492, 0.0
      %v509 = vmax.f32 %v493, 0.0
      %v510 = vmax.f32 %v494, 0.0
      %v511 = vmax.f32 %v495, 0.0
      %v512 = vmax.f32 %v496, 0.0
      %v513 = vmax.f32 %v497, 0.0
      %v514 = vmax.f32 %v498, 0.0
      %v515 = vpack.c.bf16 %v499, %v499
      %v516 = vpack.c.bf16 %v500, %v500
      %v517 = vpack.c.bf16 %v501, %v501
      %v518 = vpack.c.bf16 %v502, %v502
      %v519 = vpack.c.bf16 %v503, %v503
      %v520 = vpack.c.bf16 %v504, %v504
      %v521 = vpack.c.bf16 %v505, %v505
      %v522 = vpack.c.bf16 %v506, %v506
      %v523 = vpack.c.bf16 %v507, %v507
      %v524 = vpack.c.bf16 %v508, %v508
      %v525 = vpack.c.bf16 %v509, %v509
      %v526 = vpack.c.bf16 %v510, %v510
      %v527 = vpack.c.bf16 %v511, %v511
      %v528 = vpack.c.bf16 %v512, %v512
      %v529 = vpack.c.bf16 %v513, %v513
      %v530 = vpack.c.bf16 %v514, %v514
      %531 = vst [vmem:[#allocation8] sm:$0xf] %v515
      %532 = vst [vmem:[#allocation8 + $0x4] sm:$0xf] %v516
      %533 = vst [vmem:[#allocation8 + $0x8] sm:$0xf] %v517
      %534 = vst [vmem:[#allocation8 + $0xc] sm:$0xf] %v518
      %535 = vst [vmem:[#allocation8 + $0x10] sm:$0xf] %v519
      %536 = vst [vmem:[#allocation8 + $0x14] sm:$0xf] %v520
      %537 = vst [vmem:[#allocation8 + $0x18] sm:$0xf] %v521
      %538 = vst [vmem:[#allocation8 + $0x1c] sm:$0xf] %v522
      %539 = vst [vmem:[#allocation8 + $0x20] sm:$0xf] %v523
      %540 = vst [vmem:[#allocation8 + $0x24] sm:$0xf] %v524
      %541 = vst [vmem:[#allocation8 + $0x28] sm:$0xf] %v525
      %542 = vst [vmem:[#allocation8 + $0x2c] sm:$0xf] %v526
      %543 = vst [vmem:[#allocation8 + $0x30] sm:$0xf] %v527
      %544 = vst [vmem:[#allocation8 + $0x34] sm:$0xf] %v528
      %545 = vst [vmem:[#allocation8 + $0x38] sm:$0xf] %v529
      %546 = vst [vmem:[#allocation8 + $0x3c] sm:$0xf] %v530
    $region33: #{tpu_custom_call.1} parent=1 // pred_fallthru
      _
    // Predicated region
    $region34: #{tpu_custom_call.1} parent=1 // pred_check
      _
    $region35: #{tpu_custom_call.1} parent=1 // pred_check_branch
      %548 = sbr.rel (0) target = $region37
    $region36: #{tpu_custom_call.1} parent=1 // pred_region
      %550 = vsyncadd [#allocation5], 0
      %s551 = sshll.u32 [#allocation8], 4
      %s552 = int_to_ptr.vmem [resolvable:$true] %s551
      %s553 = sshll.u32 %s4, 4
      %s554 = int_to_ptr.hbm [resolvable:$true] %s553
      %559 = dma.vmem_to_hbm [thread:$0]  %s552, 1024, %s554, [#allocation5], 64, 64, 4
    $region37: #{tpu_custom_call.1} parent=1 // pred_fallthru
      _
    // Predicated region
    $region38: #{tpu_custom_call.1} parent=1 // pred_check
      _
    $region39: #{tpu_custom_call.1} parent=1 // pred_check_branch
      %561 = sbr.rel (0) target = $region41
    $region40: #{tpu_custom_call.1} parent=1 // pred_region
      %563 = dma.done [#allocation5], 1024
    $region41: #{tpu_custom_call.1} parent=1 // pred_fallthru
      _
    %564 = vsyncpa [#allocation4], 1
    %565 = vsyncpa [#allocation7], 1
    %566 = vsyncpa [#allocation5], 1

</llo_original>
